<compile_context>
chip_gen: v6e
topology: v6e:2x2x1
jax: 0.10.0
libtpu: 0.0.40
codegen_flags: <defaults>
</compile_context>

<pallas_src>
import functools

import numpy as np
import jax
import jax.numpy as jnp
from jax.experimental import pallas as pl
from jax.experimental.pallas import tpu as pltpu


def _cdiv(a, b):
    return -(-a // b)


def _round_up(a, m):
    return _cdiv(a, m) * m


# ----------------------------------------------------------------------------
# Pallas kernel: fused Conv2d(stride=1) + bias + activation.
# Grid = (batch, spatial q-tile).
# ----------------------------------------------------------------------------
def _conv_bias_act_kernel(x_ref, w_ref, b_ref, s_ref, o_ref, xpad_ref, rhs_ref,
                          *, h, w, wp, pad, kh, kw, cin, cin_blk, q_tile,
                          activation):
    """
    x_ref   : (1, Cin, H*W)       f32   unpadded image (same block for all t)
    w_ref   : (Cout, K)           bf16  tap-folded weights, K = kh*kw*cin_blk
    b_ref   : (Cout, 1)           f32   bias
    s_ref   : (Cout, 1)           f32   PReLU / LeakyReLU negative slope
    o_ref   : (1, Cout, q_tile)   f32   lane-dense output tile
    xpad_ref: (n_qt, Cin, q_win)  bf16  scratch: zero-padded per-tile windows
    rhs_ref : (K, q_tile)         bf16  scratch: stacked shifted windows
    """
    t = pl.program_id(1)
    n_qt, _, q_win = xpad_ref.shape

    # Build every q-tile's zero-padded, row-flattened window once per batch
    # element (fuses the spatial pad and the f32 -> bf16 cast; avoids a padded
    # copy of x in HBM).  All offsets below are static Python ints.
    @pl.when(t == 0)
    def _init():
        xpad_ref[...] = jnp.zeros_like(xpad_ref)
        if cin_blk != cin:
            rhs_ref[...] = jnp.zeros_like(rhs_ref)   # zero the K-padding rows
        for tt in range(n_qt):
            base = tt * q_tile                        # padded flat col of window start
            for r in range(h):
                row0 = (r + pad) * wp + pad           # padded flat col of row r, x = 0
                lo = max(row0, base)
                hi = min(row0 + w, base + q_win)
                if lo >= hi:
                    continue
                xpad_ref[tt, :, pl.ds(lo - base, hi - lo)] = (
                    x_ref[0, :, pl.ds(r * w + (lo - row0), hi - lo)]
                    .astype(xpad_ref.dtype))

    # Stack the kh*kw shifted windows into a single (K, q_tile) RHS so the
    # whole conv tile is ONE MXU matmul with K = kh*kw*cin_blk (instead of
    # kh*kw matmuls with K = Cin plus VPU accumulate passes).
    for tap in range(kh * kw):
        i, j = divmod(tap, kw)
        rhs_ref[pl.ds(tap * cin_blk, cin), :] = xpad_ref[t, :, pl.ds(i * wp + j, q_tile)]

    # Single lane-dense transposed GEMM: (Cout, K) @ (K, q_tile), f32 accum.
    acc = jnp.dot(w_ref[...], rhs_ref[...], preferred_element_type=jnp.float32)
    acc = acc + b_ref[...]                            # (Cout, 1) broadcast

    if activation in ("prelu", "lrelu"):
        acc = jnp.where(acc >= 0.0, acc, s_ref[...] * acc)
    elif activation == "relu":
        acc = jnp.maximum(acc, 0.0)
    elif activation == "tanh":
        acc = jnp.tanh(acc)
    elif activation == "sigmoid":
        acc = jax.nn.sigmoid(acc)                     # EUP path
    # activation is None -> identity

    o_ref[0] = acc.astype(o_ref.dtype)


# ----------------------------------------------------------------------------
# ConvBlock.forward wrapper (layout glue around one pallas_call).
# ----------------------------------------------------------------------------
def conv_block_forward(x, weight, bias, act_param=None, *,
                       stride=1, padding=1, activation="prelu", norm=None):
    """
    x:      (N, Cin, H, W) f32   NCHW (PyTorch layout)
    weight: (Cout, Cin, kh, kw) f32
    bias:   (Cout,) f32
    act_param: PReLU negative slope, scalar or (Cout,), when activation=='prelu'.
    Returns (N, Cout, Ho, Wo) f32.
    """
    if norm is not None:
        raise NotImplementedError("TODO(synk): batch/instance norm branch")
    if stride != 1:
        raise NotImplementedError("TODO(synk): stride > 1 conv path")

    n, cin, h, w = x.shape
    cout, _, kh, kw = weight.shape
    hp, wp = h + 2 * padding, w + 2 * padding
    ho, wo = hp - kh + 1, wp - kw + 1
    q = ho * wp                                 # flattened padded-width columns

    # Spatial (lane) tiling: multiple of 128, aim for >= 2 tiles per batch.
    q_tile = max(128, min(1024, _round_up(_cdiv(q, 2), 128)))
    n_qt = _cdiv(q, q_tile)
    q_pad = n_qt * q_tile
    halo = (kh - 1) * wp + (kw - 1)             # max static tap shift
    q_win = q_tile + halo                       # per-tile window incl. halo

    cin_blk = _round_up(cin, 8)                 # sublane-aligned K blocks
    kdim = kh * kw * cin_blk

    # ---- layout glue (no padded HBM copy of x; reshape is contiguous) ----
    xflat = x.reshape(n, cin, h * w)

    # w[co, ci, i, j] -> w_flat[co, (i*kw + j)*cin_blk + ci]  (bf16, zero K-pad)
    wt = jnp.transpose(weight, (0, 2, 3, 1))    # (Cout, kh, kw, Cin)
    if cin_blk != cin:
        wt = jnp.pad(wt, ((0, 0), (0, 0), (0, 0), (0, cin_blk - cin)))
    w_flat = wt.reshape(cout, kdim).astype(jnp.bfloat16)

    b2 = bias.reshape(cout, 1).astype(jnp.float32)

    if activation == "prelu":
        ap = 0.25 if act_param is None else act_param       # nn.PReLU() default
        slope = jnp.broadcast_to(
            jnp.asarray(ap, jnp.float32).reshape(-1, 1), (cout, 1))
    elif activation == "lrelu":
        slope = jnp.full((cout, 1), 0.2, jnp.float32)
    else:
        slope = jnp.zeros((cout, 1), jnp.float32)
    slope = slope.astype(jnp.float32)

    kernel = functools.partial(
        _conv_bias_act_kernel, h=h, w=w, wp=wp, pad=padding, kh=kh, kw=kw,
        cin=cin, cin_blk=cin_blk, q_tile=q_tile, activation=activation)

    # VMEM budget: double-buffered blocks + persistent scratches, with headroom.
    est = (2 * cin * h * w * 4            # image block
           + 2 * cout * kdim * 2          # folded weights
           + 4 * cout * 4                 # bias + slope
           + 2 * cout * q_tile * 4        # output tile
           + n_qt * cin * q_win * 2       # padded-window scratch
           + kdim * q_tile * 2)           # stacked RHS scratch
    vmem_limit = int(min(max(2 * est + (4 << 20), 16 << 20), 48 << 20))

    out = pl.pallas_call(
        kernel,
        out_shape=jax.ShapeDtypeStruct((n, cout, q_pad), jnp.float32),
        grid=(n, n_qt),
        in_specs=[
            pl.BlockSpec((1, cin, h * w), lambda b, t: (b, 0, 0)),   # image (reused over t)
            pl.BlockSpec((cout, kdim),    lambda b, t: (0, 0)),      # folded weights
            pl.BlockSpec((cout, 1),       lambda b, t: (0, 0)),      # bias
            pl.BlockSpec((cout, 1),       lambda b, t: (0, 0)),      # slope
        ],
        out_specs=pl.BlockSpec((1, cout, q_tile), lambda b, t: (b, 0, t)),
        scratch_shapes=[
            pltpu.VMEM((n_qt, cin, q_win), jnp.bfloat16),            # padded windows
            pltpu.VMEM((kdim, q_tile), jnp.bfloat16),                # stacked RHS
        ],
        compiler_params=pltpu.CompilerParams(
            dimension_semantics=("parallel", "arbitrary"),
            vmem_limit_bytes=vmem_limit),
    )(xflat, w_flat, b2, slope)

    # Columns x >= Wo wrap into the next padded row -> crop. NCHW out.
    return out[:, :, :q].reshape(n, cout, ho, wp)[:, :, :, :wo]


# ----------------------------------------------------------------------------
if __name__ == "__main__":
    N, Cin, H, W = 2, 4, 16, 16
    Cout, K, stride, pad = 8, 3, 1, 1

    key = jax.random.PRNGKey(0)
    kx, kwgt, kb = jax.random.split(key, 3)
    bound = 1.0 / np.sqrt(Cin * K * K)
    x = jax.random.normal(kx, (N, Cin, H, W), jnp.float32)
    weight = jax.random.uniform(kwgt, (Cout, Cin, K, K), jnp.float32, -bound, bound)
    bias = jax.random.uniform(kb, (Cout,), jnp.float32, -bound, bound)
    prelu_w = jnp.float32(0.25)            # nn.PReLU() default init (learnable)

    out = conv_block_forward(x, weight, bias, prelu_w,
                             stride=stride, padding=pad,
                             activation="prelu", norm=None)
    out = jax.block_until_ready(out)

    # Plain-XLA f32 reference for correctness.
    ref = jax.lax.conv_general_dilated(
        x, weight, window_strides=(1, 1),
        padding=((pad, pad), (pad, pad)),
        dimension_numbers=("NCHW", "OIHW", "NCHW"))
    ref = ref + bias.reshape(1, Cout, 1, 1)
    ref = jnp.where(ref >= 0, ref, prelu_w * ref)

    assert out.shape == (N, Cout, H, W)
    assert bool(jnp.all(jnp.isfinite(out)))
    np.testing.assert_allclose(np.asarray(out), np.asarray(ref),
                               atol=2e-2, rtol=2e-2)

    print("KERNEL_OK")
</pallas_src>

<mosaic_0001>
module attributes {stable_mosaic.version = 11 : i64} {
  func.func @_conv_bias_act_kernel(%arg0: i32, %arg1: i32, %arg2: memref<1x4x256xf32, #tpu.memory_space<vmem>>, %arg3: memref<8x72xbf16, #tpu.memory_space<vmem>>, %arg4: memref<8x1xf32, #tpu.memory_space<vmem>>, %arg5: memref<8x1xf32, #tpu.memory_space<vmem>>, %arg6: memref<1x8x256xf32, #tpu.memory_space<vmem>>, %arg7: memref<2x4x294xbf16, #tpu.memory_space<vmem>>, %arg8: memref<72x256xbf16, #tpu.memory_space<vmem>>) attributes {dimension_semantics = [#tpu.dimension_semantics<parallel>, #tpu.dimension_semantics<arbitrary>], iteration_bounds = array<i64: 2, 2>, scalar_prefetch = 0 : i64, scratch_operands = 2 : i64, tpu.core_type = #tpu.core_type<tc>, window_params = [{transform_indices = @transform_0, window_bounds = array<i64: 1, 4, 256>}, {pipeline_mode = #tpu.pipeline_mode<synchronous>, transform_indices = @transform_1, window_bounds = array<i64: 8, 72>}, {pipeline_mode = #tpu.pipeline_mode<synchronous>, transform_indices = @transform_2, window_bounds = array<i64: 8, 1>}, {pipeline_mode = #tpu.pipeline_mode<synchronous>, transform_indices = @transform_3, window_bounds = array<i64: 8, 1>}, {transform_indices = @transform_4, window_bounds = array<i64: 1, 8, 256>}]} {
    %c0_i32 = arith.constant 0 : i32
    %0 = arith.cmpi eq, %arg1, %c0_i32 : i32
    %1 = arith.extui %0 : i1 to i32
    %c0_i32_0 = arith.constant 0 : i32
    %2 = arith.cmpi ne, %1, %c0_i32_0 : i32
    scf.if %2 {
      %cst_32 = arith.constant 0.000000e+00 : bf16
      %54 = vector.broadcast %cst_32 : bf16 to vector<2x4x294xbf16>
      %c0_33 = arith.constant 0 : index
      %c0_34 = arith.constant 0 : index
      %c0_35 = arith.constant 0 : index
      %55 = vector.load %arg7[%c0_33, %c0_34, %c0_35] : memref<2x4x294xbf16, #tpu.memory_space<vmem>>, vector<2x4x294xbf16>
      tpu.vector_store %arg7[%c0_33, %c0_34, %c0_35], %54 {strides = array<i32>} : memref<2x4x294xbf16, #tpu.memory_space<vmem>>, vector<2x4x294xbf16>,
      %cst_36 = arith.constant 0.000000e+00 : bf16
      %56 = vector.broadcast %cst_36 : bf16 to vector<72x256xbf16>
      %c0_37 = arith.constant 0 : index
      %c0_38 = arith.constant 0 : index
      %57 = vector.load %arg8[%c0_37, %c0_38] : memref<72x256xbf16, #tpu.memory_space<vmem>>, vector<72x256xbf16>
      tpu.vector_store %arg8[%c0_37, %c0_38], %56 {strides = array<i32>} : memref<72x256xbf16, #tpu.memory_space<vmem>>, vector<72x256xbf16>,
      %c0_39 = arith.constant 0 : index
      %c0_40 = arith.constant 0 : index
      %c0_41 = arith.constant 0 : index
      %58 = vector.load %arg2[%c0_39, %c0_40, %c0_41] : memref<1x4x256xf32, #tpu.memory_space<vmem>>, vector<1x4x16xf32>
      %59 = vector.shape_cast %58 : vector<1x4x16xf32> to vector<4x16xf32>
      %60 = arith.truncf %59 : vector<4x16xf32> to vector<4x16xbf16>
      %c0_42 = arith.constant 0 : index
      %c0_43 = arith.constant 0 : index
      %c19_44 = arith.constant 19 : index
      %61 = vector.load %arg7[%c0_42, %c0_43, %c19_44] : memref<2x4x294xbf16, #tpu.memory_space<vmem>>, vector<1x4x16xbf16>
      %62 = vector.shape_cast %61 : vector<1x4x16xbf16> to vector<4x16xbf16>
      %63 = vector.shape_cast %60 : vector<4x16xbf16> to vector<1x4x16xbf16>
      tpu.vector_store %arg7[%c0_42, %c0_43, %c19_44], %63 {strides = array<i32>} : memref<2x4x294xbf16, #tpu.memory_space<vmem>>, vector<1x4x16xbf16>,
      %c0_45 = arith.constant 0 : index
      %c0_46 = arith.constant 0 : index
      %c16_47 = arith.constant 16 : index
      %64 = vector.load %arg2[%c0_45, %c0_46, %c16_47] : memref<1x4x256xf32, #tpu.memory_space<vmem>>, vector<1x4x16xf32>
      %65 = vector.shape_cast %64 : vector<1x4x16xf32> to vector<4x16xf32>
      %66 = arith.truncf %65 : vector<4x16xf32> to vector<4x16xbf16>
      %c0_48 = arith.constant 0 : index
      %c0_49 = arith.constant 0 : index
      %c37_50 = arith.constant 37 : index
      %67 = vector.load %arg7[%c0_48, %c0_49, %c37_50] : memref<2x4x294xbf16, #tpu.memory_space<vmem>>, vector<1x4x16xbf16>
      %68 = vector.shape_cast %67 : vector<1x4x16xbf16> to vector<4x16xbf16>
      %69 = vector.shape_cast %66 : vector<4x16xbf16> to vector<1x4x16xbf16>
      tpu.vector_store %arg7[%c0_48, %c0_49, %c37_50], %69 {strides = array<i32>} : memref<2x4x294xbf16, #tpu.memory_space<vmem>>, vector<1x4x16xbf16>,
      %c0_51 = arith.constant 0 : index
      %c0_52 = arith.constant 0 : index
      %c32_53 = arith.constant 32 : index
      %70 = vector.load %arg2[%c0_51, %c0_52, %c32_53] : memref<1x4x256xf32, #tpu.memory_space<vmem>>, vector<1x4x16xf32>
      %71 = vector.shape_cast %70 : vector<1x4x16xf32> to vector<4x16xf32>
      %72 = arith.truncf %71 : vector<4x16xf32> to vector<4x16xbf16>
      %c0_54 = arith.constant 0 : index
      %c0_55 = arith.constant 0 : index
      %c55 = arith.constant 55 : index
      %73 = vector.load %arg7[%c0_54, %c0_55, %c55] : memref<2x4x294xbf16, #tpu.memory_space<vmem>>, vector<1x4x16xbf16>
      %74 = vector.shape_cast %73 : vector<1x4x16xbf16> to vector<4x16xbf16>
      %75 = vector.shape_cast %72 : vector<4x16xbf16> to vector<1x4x16xbf16>
      tpu.vector_store %arg7[%c0_54, %c0_55, %c55], %75 {strides = array<i32>} : memref<2x4x294xbf16, #tpu.memory_space<vmem>>, vector<1x4x16xbf16>,
      %c0_56 = arith.constant 0 : index
      %c0_57 = arith.constant 0 : index
      %c48_58 = arith.constant 48 : index
      %76 = vector.load %arg2[%c0_56, %c0_57, %c48_58] : memref<1x4x256xf32, #tpu.memory_space<vmem>>, vector<1x4x16xf32>
      %77 = vector.shape_cast %76 : vector<1x4x16xf32> to vector<4x16xf32>
      %78 = arith.truncf %77 : vector<4x16xf32> to vector<4x16xbf16>
      %c0_59 = arith.constant 0 : index
      %c0_60 = arith.constant 0 : index
      %c73 = arith.constant 73 : index
      %79 = vector.load %arg7[%c0_59, %c0_60, %c73] : memref<2x4x294xbf16, #tpu.memory_space<vmem>>, vector<1x4x16xbf16>
      %80 = vector.shape_cast %79 : vector<1x4x16xbf16> to vector<4x16xbf16>
      %81 = vector.shape_cast %78 : vector<4x16xbf16> to vector<1x4x16xbf16>
      tpu.vector_store %arg7[%c0_59, %c0_60, %c73], %81 {strides = array<i32>} : memref<2x4x294xbf16, #tpu.memory_space<vmem>>, vector<1x4x16xbf16>,
      %c0_61 = arith.constant 0 : index
      %c0_62 = arith.constant 0 : index
      %c64_63 = arith.constant 64 : index
      %82 = vector.load %arg2[%c0_61, %c0_62, %c64_63] : memref<1x4x256xf32, #tpu.memory_space<vmem>>, vector<1x4x16xf32>
      %83 = vector.shape_cast %82 : vector<1x4x16xf32> to vector<4x16xf32>
      %84 = arith.truncf %83 : vector<4x16xf32> to vector<4x16xbf16>
      %c0_64 = arith.constant 0 : index
      %c0_65 = arith.constant 0 : index
      %c91 = arith.constant 91 : index
      %85 = vector.load %arg7[%c0_64, %c0_65, %c91] : memref<2x4x294xbf16, #tpu.memory_space<vmem>>, vector<1x4x16xbf16>
      %86 = vector.shape_cast %85 : vector<1x4x16xbf16> to vector<4x16xbf16>
      %87 = vector.shape_cast %84 : vector<4x16xbf16> to vector<1x4x16xbf16>
      tpu.vector_store %arg7[%c0_64, %c0_65, %c91], %87 {strides = array<i32>} : memref<2x4x294xbf16, #tpu.memory_space<vmem>>, vector<1x4x16xbf16>,
      %c0_66 = arith.constant 0 : index
      %c0_67 = arith.constant 0 : index
      %c80 = arith.constant 80 : index
      %88 = vector.load %arg2[%c0_66, %c0_67, %c80] : memref<1x4x256xf32, #tpu.memory_space<vmem>>, vector<1x4x16xf32>
      %89 = vector.shape_cast %88 : vector<1x4x16xf32> to vector<4x16xf32>
      %90 = arith.truncf %89 : vector<4x16xf32> to vector<4x16xbf16>
      %c0_68 = arith.constant 0 : index
      %c0_69 = arith.constant 0 : index
      %c109 = arith.constant 109 : index
      %91 = vector.load %arg7[%c0_68, %c0_69, %c109] : memref<2x4x294xbf16, #tpu.memory_space<vmem>>, vector<1x4x16xbf16>
      %92 = vector.shape_cast %91 : vector<1x4x16xbf16> to vector<4x16xbf16>
      %93 = vector.shape_cast %90 : vector<4x16xbf16> to vector<1x4x16xbf16>
      tpu.vector_store %arg7[%c0_68, %c0_69, %c109], %93 {strides = array<i32>} : memref<2x4x294xbf16, #tpu.memory_space<vmem>>, vector<1x4x16xbf16>,
      %c0_70 = arith.constant 0 : index
      %c0_71 = arith.constant 0 : index
      %c96 = arith.constant 96 : index
      %94 = vector.load %arg2[%c0_70, %c0_71, %c96] : memref<1x4x256xf32, #tpu.memory_space<vmem>>, vector<1x4x16xf32>
      %95 = vector.shape_cast %94 : vector<1x4x16xf32> to vector<4x16xf32>
      %96 = arith.truncf %95 : vector<4x16xf32> to vector<4x16xbf16>
      %c0_72 = arith.constant 0 : index
      %c0_73 = arith.constant 0 : index
      %c127 = arith.constant 127 : index
      %97 = vector.load %arg7[%c0_72, %c0_73, %c127] : memref<2x4x294xbf16, #tpu.memory_space<vmem>>, vector<1x4x16xbf16>
      %98 = vector.shape_cast %97 : vector<1x4x16xbf16> to vector<4x16xbf16>
      %99 = vector.shape_cast %96 : vector<4x16xbf16> to vector<1x4x16xbf16>
      tpu.vector_store %arg7[%c0_72, %c0_73, %c127], %99 {strides = array<i32>} : memref<2x4x294xbf16, #tpu.memory_space<vmem>>, vector<1x4x16xbf16>,
      %c0_74 = arith.constant 0 : index
      %c0_75 = arith.constant 0 : index
      %c112 = arith.constant 112 : index
      %100 = vector.load %arg2[%c0_74, %c0_75, %c112] : memref<1x4x256xf32, #tpu.memory_space<vmem>>, vector<1x4x16xf32>
      %101 = vector.shape_cast %100 : vector<1x4x16xf32> to vector<4x16xf32>
      %102 = arith.truncf %101 : vector<4x16xf32> to vector<4x16xbf16>
      %c0_76 = arith.constant 0 : index
      %c0_77 = arith.constant 0 : index
      %c145 = arith.constant 145 : index
      %103 = vector.load %arg7[%c0_76, %c0_77, %c145] : memref<2x4x294xbf16, #tpu.memory_space<vmem>>, vector<1x4x16xbf16>
      %104 = vector.shape_cast %103 : vector<1x4x16xbf16> to vector<4x16xbf16>
      %105 = vector.shape_cast %102 : vector<4x16xbf16> to vector<1x4x16xbf16>
      tpu.vector_store %arg7[%c0_76, %c0_77, %c145], %105 {strides = array<i32>} : memref<2x4x294xbf16, #tpu.memory_space<vmem>>, vector<1x4x16xbf16>,
      %c0_78 = arith.constant 0 : index
      %c0_79 = arith.constant 0 : index
      %c128 = arith.constant 128 : index
      %106 = vector.load %arg2[%c0_78, %c0_79, %c128] : memref<1x4x256xf32, #tpu.memory_space<vmem>>, vector<1x4x16xf32>
      %107 = vector.shape_cast %106 : vector<1x4x16xf32> to vector<4x16xf32>
      %108 = arith.truncf %107 : vector<4x16xf32> to vector<4x16xbf16>
      %c0_80 = arith.constant 0 : index
      %c0_81 = arith.constant 0 : index
      %c163 = arith.constant 163 : index
      %109 = vector.load %arg7[%c0_80, %c0_81, %c163] : memref<2x4x294xbf16, #tpu.memory_space<vmem>>, vector<1x4x16xbf16>
      %110 = vector.shape_cast %109 : vector<1x4x16xbf16> to vector<4x16xbf16>
      %111 = vector.shape_cast %108 : vector<4x16xbf16> to vector<1x4x16xbf16>
      tpu.vector_store %arg7[%c0_80, %c0_81, %c163], %111 {strides = array<i32>} : memref<2x4x294xbf16, #tpu.memory_space<vmem>>, vector<1x4x16xbf16>,
      %c0_82 = arith.constant 0 : index
      %c0_83 = arith.constant 0 : index
      %c144 = arith.constant 144 : index
      %112 = vector.load %arg2[%c0_82, %c0_83, %c144] : memref<1x4x256xf32, #tpu.memory_space<vmem>>, vector<1x4x16xf32>
      %113 = vector.shape_cast %112 : vector<1x4x16xf32> to vector<4x16xf32>
      %114 = arith.truncf %113 : vector<4x16xf32> to vector<4x16xbf16>
      %c0_84 = arith.constant 0 : index
      %c0_85 = arith.constant 0 : index
      %c181 = arith.constant 181 : index
      %115 = vector.load %arg7[%c0_84, %c0_85, %c181] : memref<2x4x294xbf16, #tpu.memory_space<vmem>>, vector<1x4x16xbf16>
      %116 = vector.shape_cast %115 : vector<1x4x16xbf16> to vector<4x16xbf16>
      %117 = vector.shape_cast %114 : vector<4x16xbf16> to vector<1x4x16xbf16>
      tpu.vector_store %arg7[%c0_84, %c0_85, %c181], %117 {strides = array<i32>} : memref<2x4x294xbf16, #tpu.memory_space<vmem>>, vector<1x4x16xbf16>,
      %c0_86 = arith.constant 0 : index
      %c0_87 = arith.constant 0 : index
      %c160 = arith.constant 160 : index
      %118 = vector.load %arg2[%c0_86, %c0_87, %c160] : memref<1x4x256xf32, #tpu.memory_space<vmem>>, vector<1x4x16xf32>
      %119 = vector.shape_cast %118 : vector<1x4x16xf32> to vector<4x16xf32>
      %120 = arith.truncf %119 : vector<4x16xf32> to vector<4x16xbf16>
      %c0_88 = arith.constant 0 : index
      %c0_89 = arith.constant 0 : index
      %c199 = arith.constant 199 : index
      %121 = vector.load %arg7[%c0_88, %c0_89, %c199] : memref<2x4x294xbf16, #tpu.memory_space<vmem>>, vector<1x4x16xbf16>
      %122 = vector.shape_cast %121 : vector<1x4x16xbf16> to vector<4x16xbf16>
      %123 = vector.shape_cast %120 : vector<4x16xbf16> to vector<1x4x16xbf16>
      tpu.vector_store %arg7[%c0_88, %c0_89, %c199], %123 {strides = array<i32>} : memref<2x4x294xbf16, #tpu.memory_space<vmem>>, vector<1x4x16xbf16>,
      %c0_90 = arith.constant 0 : index
      %c0_91 = arith.constant 0 : index
      %c176 = arith.constant 176 : index
      %124 = vector.load %arg2[%c0_90, %c0_91, %c176] : memref<1x4x256xf32, #tpu.memory_space<vmem>>, vector<1x4x16xf32>
      %125 = vector.shape_cast %124 : vector<1x4x16xf32> to vector<4x16xf32>
      %126 = arith.truncf %125 : vector<4x16xf32> to vector<4x16xbf16>
      %c0_92 = arith.constant 0 : index
      %c0_93 = arith.constant 0 : index
      %c217 = arith.constant 217 : index
      %127 = vector.load %arg7[%c0_92, %c0_93, %c217] : memref<2x4x294xbf16, #tpu.memory_space<vmem>>, vector<1x4x16xbf16>
      %128 = vector.shape_cast %127 : vector<1x4x16xbf16> to vector<4x16xbf16>
      %129 = vector.shape_cast %126 : vector<4x16xbf16> to vector<1x4x16xbf16>
      tpu.vector_store %arg7[%c0_92, %c0_93, %c217], %129 {strides = array<i32>} : memref<2x4x294xbf16, #tpu.memory_space<vmem>>, vector<1x4x16xbf16>,
      %c0_94 = arith.constant 0 : index
      %c0_95 = arith.constant 0 : index
      %c192 = arith.constant 192 : index
      %130 = vector.load %arg2[%c0_94, %c0_95, %c192] : memref<1x4x256xf32, #tpu.memory_space<vmem>>, vector<1x4x16xf32>
      %131 = vector.shape_cast %130 : vector<1x4x16xf32> to vector<4x16xf32>
      %132 = arith.truncf %131 : vector<4x16xf32> to vector<4x16xbf16>
      %c0_96 = arith.constant 0 : index
      %c0_97 = arith.constant 0 : index
      %c235 = arith.constant 235 : index
      %133 = vector.load %arg7[%c0_96, %c0_97, %c235] : memref<2x4x294xbf16, #tpu.memory_space<vmem>>, vector<1x4x16xbf16>
      %134 = vector.shape_cast %133 : vector<1x4x16xbf16> to vector<4x16xbf16>
      %135 = vector.shape_cast %132 : vector<4x16xbf16> to vector<1x4x16xbf16>
      tpu.vector_store %arg7[%c0_96, %c0_97, %c235], %135 {strides = array<i32>} : memref<2x4x294xbf16, #tpu.memory_space<vmem>>, vector<1x4x16xbf16>,
      %c0_98 = arith.constant 0 : index
      %c0_99 = arith.constant 0 : index
      %c208 = arith.constant 208 : index
      %136 = vector.load %arg2[%c0_98, %c0_99, %c208] : memref<1x4x256xf32, #tpu.memory_space<vmem>>, vector<1x4x16xf32>
      %137 = vector.shape_cast %136 : vector<1x4x16xf32> to vector<4x16xf32>
      %138 = arith.truncf %137 : vector<4x16xf32> to vector<4x16xbf16>
      %c0_100 = arith.constant 0 : index
      %c0_101 = arith.constant 0 : index
      %c253 = arith.constant 253 : index
      %139 = vector.load %arg7[%c0_100, %c0_101, %c253] : memref<2x4x294xbf16, #tpu.memory_space<vmem>>, vector<1x4x16xbf16>
      %140 = vector.shape_cast %139 : vector<1x4x16xbf16> to vector<4x16xbf16>
      %141 = vector.shape_cast %138 : vector<4x16xbf16> to vector<1x4x16xbf16>
      tpu.vector_store %arg7[%c0_100, %c0_101, %c253], %141 {strides = array<i32>} : memref<2x4x294xbf16, #tpu.memory_space<vmem>>, vector<1x4x16xbf16>,
      %c0_102 = arith.constant 0 : index
      %c0_103 = arith.constant 0 : index
      %c224 = arith.constant 224 : index
      %142 = vector.load %arg2[%c0_102, %c0_103, %c224] : memref<1x4x256xf32, #tpu.memory_space<vmem>>, vector<1x4x16xf32>
      %143 = vector.shape_cast %142 : vector<1x4x16xf32> to vector<4x16xf32>
      %144 = arith.truncf %143 : vector<4x16xf32> to vector<4x16xbf16>
      %c0_104 = arith.constant 0 : index
      %c0_105 = arith.constant 0 : index
      %c271 = arith.constant 271 : index
      %145 = vector.load %arg7[%c0_104, %c0_105, %c271] : memref<2x4x294xbf16, #tpu.memory_space<vmem>>, vector<1x4x16xbf16>
      %146 = vector.shape_cast %145 : vector<1x4x16xbf16> to vector<4x16xbf16>
      %147 = vector.shape_cast %144 : vector<4x16xbf16> to vector<1x4x16xbf16>
      tpu.vector_store %arg7[%c0_104, %c0_105, %c271], %147 {strides = array<i32>} : memref<2x4x294xbf16, #tpu.memory_space<vmem>>, vector<1x4x16xbf16>,
      %c0_106 = arith.constant 0 : index
      %c0_107 = arith.constant 0 : index
      %c240 = arith.constant 240 : index
      %148 = vector.load %arg2[%c0_106, %c0_107, %c240] : memref<1x4x256xf32, #tpu.memory_space<vmem>>, vector<1x4x5xf32>
      %149 = vector.shape_cast %148 : vector<1x4x5xf32> to vector<4x5xf32>
      %150 = arith.truncf %149 : vector<4x5xf32> to vector<4x5xbf16>
      %c0_108 = arith.constant 0 : index
      %c0_109 = arith.constant 0 : index
      %c289 = arith.constant 289 : index
      %151 = vector.load %arg7[%c0_108, %c0_109, %c289] : memref<2x4x294xbf16, #tpu.memory_space<vmem>>, vector<1x4x5xbf16>
      %152 = vector.shape_cast %151 : vector<1x4x5xbf16> to vector<4x5xbf16>
      %153 = vector.shape_cast %150 : vector<4x5xbf16> to vector<1x4x5xbf16>
      tpu.vector_store %arg7[%c0_108, %c0_109, %c289], %153 {strides = array<i32>} : memref<2x4x294xbf16, #tpu.memory_space<vmem>>, vector<1x4x5xbf16>,
      %c0_110 = arith.constant 0 : index
      %c0_111 = arith.constant 0 : index
      %c211 = arith.constant 211 : index
      %154 = vector.load %arg2[%c0_110, %c0_111, %c211] : memref<1x4x256xf32, #tpu.memory_space<vmem>>, vector<1x4x13xf32>
      %155 = vector.shape_cast %154 : vector<1x4x13xf32> to vector<4x13xf32>
      %156 = arith.truncf %155 : vector<4x13xf32> to vector<4x13xbf16>
      %c1_112 = arith.constant 1 : index
      %c0_113 = arith.constant 0 : index
      %c0_114 = arith.constant 0 : index
      %157 = vector.load %arg7[%c1_112, %c0_113, %c0_114] : memref<2x4x294xbf16, #tpu.memory_space<vmem>>, vector<1x4x13xbf16>
      %158 = vector.shape_cast %157 : vector<1x4x13xbf16> to vector<4x13xbf16>
      %159 = vector.shape_cast %156 : vector<4x13xbf16> to vector<1x4x13xbf16>
      tpu.vector_store %arg7[%c1_112, %c0_113, %c0_114], %159 {strides = array<i32>} : memref<2x4x294xbf16, #tpu.memory_space<vmem>>, vector<1x4x13xbf16>,
      %c0_115 = arith.constant 0 : index
      %c0_116 = arith.constant 0 : index
      %c224_117 = arith.constant 224 : index
      %160 = vector.load %arg2[%c0_115, %c0_116, %c224_117] : memref<1x4x256xf32, #tpu.memory_space<vmem>>, vector<1x4x16xf32>
      %161 = vector.shape_cast %160 : vector<1x4x16xf32> to vector<4x16xf32>
      %162 = arith.truncf %161 : vector<4x16xf32> to vector<4x16xbf16>
      %c1_118 = arith.constant 1 : index
      %c0_119 = arith.constant 0 : index
      %c15 = arith.constant 15 : index
      %163 = vector.load %arg7[%c1_118, %c0_119, %c15] : memref<2x4x294xbf16, #tpu.memory_space<vmem>>, vector<1x4x16xbf16>
      %164 = vector.shape_cast %163 : vector<1x4x16xbf16> to vector<4x16xbf16>
      %165 = vector.shape_cast %162 : vector<4x16xbf16> to vector<1x4x16xbf16>
      tpu.vector_store %arg7[%c1_118, %c0_119, %c15], %165 {strides = array<i32>} : memref<2x4x294xbf16, #tpu.memory_space<vmem>>, vector<1x4x16xbf16>,
      %c0_120 = arith.constant 0 : index
      %c0_121 = arith.constant 0 : index
      %c240_122 = arith.constant 240 : index
      %166 = vector.load %arg2[%c0_120, %c0_121, %c240_122] : memref<1x4x256xf32, #tpu.memory_space<vmem>>, vector<1x4x16xf32>
      %167 = vector.shape_cast %166 : vector<1x4x16xf32> to vector<4x16xf32>
      %168 = arith.truncf %167 : vector<4x16xf32> to vector<4x16xbf16>
      %c1_123 = arith.constant 1 : index
      %c0_124 = arith.constant 0 : index
      %c33 = arith.constant 33 : index
      %169 = vector.load %arg7[%c1_123, %c0_124, %c33] : memref<2x4x294xbf16, #tpu.memory_space<vmem>>, vector<1x4x16xbf16>
      %170 = vector.shape_cast %169 : vector<1x4x16xbf16> to vector<4x16xbf16>
      %171 = vector.shape_cast %168 : vector<4x16xbf16> to vector<1x4x16xbf16>
      tpu.vector_store %arg7[%c1_123, %c0_124, %c33], %171 {strides = array<i32>} : memref<2x4x294xbf16, #tpu.memory_space<vmem>>, vector<1x4x16xbf16>,
    } else {
    }
    %3 = arith.index_cast %arg1 : i32 to index
    %c0 = arith.constant 0 : index
    %c0_1 = arith.constant 0 : index
    %4 = vector.load %arg7[%3, %c0, %c0_1] : memref<2x4x294xbf16, #tpu.memory_space<vmem>>, vector<1x4x256xbf16>
    %5 = vector.shape_cast %4 : vector<1x4x256xbf16> to vector<4x256xbf16>
    %c0_2 = arith.constant 0 : index
    %c0_3 = arith.constant 0 : index
    %6 = vector.load %arg8[%c0_2, %c0_3] : memref<72x256xbf16, #tpu.memory_space<vmem>>, vector<4x256xbf16>
    tpu.vector_store %arg8[%c0_2, %c0_3], %5 {strides = array<i32>} : memref<72x256xbf16, #tpu.memory_space<vmem>>, vector<4x256xbf16>,
    %7 = arith.index_cast %arg1 : i32 to index
    %c0_4 = arith.constant 0 : index
    %c1 = arith.constant 1 : index
    %8 = vector.load %arg7[%7, %c0_4, %c1] : memref<2x4x294xbf16, #tpu.memory_space<vmem>>, vector<1x4x256xbf16>
    %9 = vector.shape_cast %8 : vector<1x4x256xbf16> to vector<4x256xbf16>
    %c8 = arith.constant 8 : index
    %c0_5 = arith.constant 0 : index
    %10 = vector.load %arg8[%c8, %c0_5] : memref<72x256xbf16, #tpu.memory_space<vmem>>, vector<4x256xbf16>
    tpu.vector_store %arg8[%c8, %c0_5], %9 {strides = array<i32>} : memref<72x256xbf16, #tpu.memory_space<vmem>>, vector<4x256xbf16>,
    %11 = arith.index_cast %arg1 : i32 to index
    %c0_6 = arith.constant 0 : index
    %c2 = arith.constant 2 : index
    %12 = vector.load %arg7[%11, %c0_6, %c2] : memref<2x4x294xbf16, #tpu.memory_space<vmem>>, vector<1x4x256xbf16>
    %13 = vector.shape_cast %12 : vector<1x4x256xbf16> to vector<4x256xbf16>
    %c16 = arith.constant 16 : index
    %c0_7 = arith.constant 0 : index
    %14 = vector.load %arg8[%c16, %c0_7] : memref<72x256xbf16, #tpu.memory_space<vmem>>, vector<4x256xbf16>
    tpu.vector_store %arg8[%c16, %c0_7], %13 {strides = array<i32>} : memref<72x256xbf16, #tpu.memory_space<vmem>>, vector<4x256xbf16>,
    %15 = arith.index_cast %arg1 : i32 to index
    %c0_8 = arith.constant 0 : index
    %c18 = arith.constant 18 : index
    %16 = vector.load %arg7[%15, %c0_8, %c18] : memref<2x4x294xbf16, #tpu.memory_space<vmem>>, vector<1x4x256xbf16>
    %17 = vector.shape_cast %16 : vector<1x4x256xbf16> to vector<4x256xbf16>
    %c24 = arith.constant 24 : index
    %c0_9 = arith.constant 0 : index
    %18 = vector.load %arg8[%c24, %c0_9] : memref<72x256xbf16, #tpu.memory_space<vmem>>, vector<4x256xbf16>
    tpu.vector_store %arg8[%c24, %c0_9], %17 {strides = array<i32>} : memref<72x256xbf16, #tpu.memory_space<vmem>>, vector<4x256xbf16>,
    %19 = arith.index_cast %arg1 : i32 to index
    %c0_10 = arith.constant 0 : index
    %c19 = arith.constant 19 : index
    %20 = vector.load %arg7[%19, %c0_10, %c19] : memref<2x4x294xbf16, #tpu.memory_space<vmem>>, vector<1x4x256xbf16>
    %21 = vector.shape_cast %20 : vector<1x4x256xbf16> to vector<4x256xbf16>
    %c32 = arith.constant 32 : index
    %c0_11 = arith.constant 0 : index
    %22 = vector.load %arg8[%c32, %c0_11] : memref<72x256xbf16, #tpu.memory_space<vmem>>, vector<4x256xbf16>
    tpu.vector_store %arg8[%c32, %c0_11], %21 {strides = array<i32>} : memref<72x256xbf16, #tpu.memory_space<vmem>>, vector<4x256xbf16>,
    %23 = arith.index_cast %arg1 : i32 to index
    %c0_12 = arith.constant 0 : index
    %c20 = arith.constant 20 : index
    %24 = vector.load %arg7[%23, %c0_12, %c20] : memref<2x4x294xbf16, #tpu.memory_space<vmem>>, vector<1x4x256xbf16>
    %25 = vector.shape_cast %24 : vector<1x4x256xbf16> to vector<4x256xbf16>
    %c40 = arith.constant 40 : index
    %c0_13 = arith.constant 0 : index
    %26 = vector.load %arg8[%c40, %c0_13] : memref<72x256xbf16, #tpu.memory_space<vmem>>, vector<4x256xbf16>
    tpu.vector_store %arg8[%c40, %c0_13], %25 {strides = array<i32>} : memref<72x256xbf16, #tpu.memory_space<vmem>>, vector<4x256xbf16>,
    %27 = arith.index_cast %arg1 : i32 to index
    %c0_14 = arith.constant 0 : index
    %c36 = arith.constant 36 : index
    %28 = vector.load %arg7[%27, %c0_14, %c36] : memref<2x4x294xbf16, #tpu.memory_space<vmem>>, vector<1x4x256xbf16>
    %29 = vector.shape_cast %28 : vector<1x4x256xbf16> to vector<4x256xbf16>
    %c48 = arith.constant 48 : index
    %c0_15 = arith.constant 0 : index
    %30 = vector.load %arg8[%c48, %c0_15] : memref<72x256xbf16, #tpu.memory_space<vmem>>, vector<4x256xbf16>
    tpu.vector_store %arg8[%c48, %c0_15], %29 {strides = array<i32>} : memref<72x256xbf16, #tpu.memory_space<vmem>>, vector<4x256xbf16>,
    %31 = arith.index_cast %arg1 : i32 to index
    %c0_16 = arith.constant 0 : index
    %c37 = arith.constant 37 : index
    %32 = vector.load %arg7[%31, %c0_16, %c37] : memref<2x4x294xbf16, #tpu.memory_space<vmem>>, vector<1x4x256xbf16>
    %33 = vector.shape_cast %32 : vector<1x4x256xbf16> to vector<4x256xbf16>
    %c56 = arith.constant 56 : index
    %c0_17 = arith.constant 0 : index
    %34 = vector.load %arg8[%c56, %c0_17] : memref<72x256xbf16, #tpu.memory_space<vmem>>, vector<4x256xbf16>
    tpu.vector_store %arg8[%c56, %c0_17], %33 {strides = array<i32>} : memref<72x256xbf16, #tpu.memory_space<vmem>>, vector<4x256xbf16>,
    %35 = arith.index_cast %arg1 : i32 to index
    %c0_18 = arith.constant 0 : index
    %c38 = arith.constant 38 : index
    %36 = vector.load %arg7[%35, %c0_18, %c38] : memref<2x4x294xbf16, #tpu.memory_space<vmem>>, vector<1x4x256xbf16>
    %37 = vector.shape_cast %36 : vector<1x4x256xbf16> to vector<4x256xbf16>
    %c64 = arith.constant 64 : index
    %c0_19 = arith.constant 0 : index
    %38 = vector.load %arg8[%c64, %c0_19] : memref<72x256xbf16, #tpu.memory_space<vmem>>, vector<4x256xbf16>
    tpu.vector_store %arg8[%c64, %c0_19], %37 {strides = array<i32>} : memref<72x256xbf16, #tpu.memory_space<vmem>>, vector<4x256xbf16>,
    %c0_20 = arith.constant 0 : index
    %c0_21 = arith.constant 0 : index
    %39 = vector.load %arg3[%c0_20, %c0_21] : memref<8x72xbf16, #tpu.memory_space<vmem>>, vector<8x72xbf16>
    %c0_22 = arith.constant 0 : index
    %c0_23 = arith.constant 0 : index
    %40 = vector.load %arg8[%c0_22, %c0_23] : memref<72x256xbf16, #tpu.memory_space<vmem>>, vector<72x256xbf16>
    %cst = arith.constant dense<0.000000e+00> : vector<8x256xf32>
    %41 = tpu.matmul %39, %40, %cst {dimension_numbers = #tpu.dot_dimension_numbers<[1], [0], [0], [1], [0, 0, 1, 1], [], []>} : vector<8x72xbf16>, vector<72x256xbf16>, vector<8x256xf32> -> vector<8x256xf32>
    %c0_24 = arith.constant 0 : index
    %c0_25 = arith.constant 0 : index
    %42 = vector.load %arg4[%c0_24, %c0_25] : memref<8x1xf32, #tpu.memory_space<vmem>>, vector<8x1xf32>
    %43 = vector.broadcast %42 : vector<8x1xf32> to vector<8x256xf32>
    %44 = arith.addf %41, %43 : vector<8x256xf32>
    %cst_26 = arith.constant 0.000000e+00 : f32
    %45 = vector.broadcast %cst_26 : f32 to vector<8x256xf32>
    %46 = arith.cmpf oge, %44, %45 : vector<8x256xf32>
    %c0_27 = arith.constant 0 : index
    %c0_28 = arith.constant 0 : index
    %47 = vector.load %arg5[%c0_27, %c0_28] : memref<8x1xf32, #tpu.memory_space<vmem>>, vector<8x1xf32>
    %48 = vector.broadcast %47 : vector<8x1xf32> to vector<8x256xf32>
    %49 = arith.mulf %48, %44 : vector<8x256xf32>
    %50 = arith.select %46, %44, %49 : vector<8x256xi1>, vector<8x256xf32>
    %c0_29 = arith.constant 0 : index
    %c0_30 = arith.constant 0 : index
    %c0_31 = arith.constant 0 : index
    %51 = vector.load %arg6[%c0_29, %c0_30, %c0_31] : memref<1x8x256xf32, #tpu.memory_space<vmem>>, vector<1x8x256xf32>
    %52 = vector.shape_cast %51 : vector<1x8x256xf32> to vector<8x256xf32>
    %53 = vector.shape_cast %50 : vector<8x256xf32> to vector<1x8x256xf32>
    tpu.vector_store %arg6[%c0_29, %c0_30, %c0_31], %53 {strides = array<i32>} : memref<1x8x256xf32, #tpu.memory_space<vmem>>, vector<1x8x256xf32>,
    return
  }
  func.func @transform_0(%arg0: i32, %arg1: i32) -> (i32, i32, i32) {
    %c0_i32 = arith.constant 0 : i32
    %c0_i32_0 = arith.constant 0 : i32
    %c0_i32_1 = arith.constant 0 : i32
    return %arg0, %c0_i32, %c0_i32_0 : i32, i32, i32
  }
  func.func @transform_1(%arg0: i32, %arg1: i32) -> (i32, i32) {
    %c0_i32 = arith.constant 0 : i32
    %c0_i32_0 = arith.constant 0 : i32
    %c0_i32_1 = arith.constant 0 : i32
    return %c0_i32, %c0_i32_0 : i32, i32
  }
  func.func @transform_2(%arg0: i32, %arg1: i32) -> (i32, i32) {
    %c0_i32 = arith.constant 0 : i32
    %c0_i32_0 = arith.constant 0 : i32
    %c0_i32_1 = arith.constant 0 : i32
    return %c0_i32, %c0_i32_0 : i32, i32
  }
  func.func @transform_3(%arg0: i32, %arg1: i32) -> (i32, i32) {
    %c0_i32 = arith.constant 0 : i32
    %c0_i32_0 = arith.constant 0 : i32
    %c0_i32_1 = arith.constant 0 : i32
    return %c0_i32, %c0_i32_0 : i32, i32
  }
  func.func @transform_4(%arg0: i32, %arg1: i32) -> (i32, i32, i32) {
    %c0_i32 = arith.constant 0 : i32
    %c0_i32_0 = arith.constant 0 : i32
    return %arg0, %c0_i32, %arg1 : i32, i32, i32
  }
}

</mosaic_0001>

<llo_original>
// kernel: tpu_custom_call.1
$region0: #{tpu_custom_call.1}
  #allocation0 [shape = 'u32[]', space=smem, size = 0x4, offset = 0x4, fixed_abs, tag = 'smem constant byte address 0x4 - core index']
  #allocation1 [shape = 'u32[144,128]{1,0:T(1,128)}', space=vmem, size = 0x12000, scoped, tag = 'internal scratch']
  #allocation2 [shape = 'bf16[2,4,294]{2,1,0:T(4,128)(2,1)}', space=vmem, size = 0x1800, scoped, tag = 'scratch operand']
  #allocation3 [shape = 'bf16[72,256]{1,0:T(8,128)(2,1)}', space=vmem, size = 0x9000, scoped, tag = 'scratch operand']
  %s0 = inlined_call_operand.vmem [shape: f32[2,4,256], index: 0, kind: input, shape index: {}]
  %s1 = inlined_call_operand.hbm [shape: bf16[8,72], index: 1, kind: input, shape index: {}]
  %s2 = inlined_call_operand.vmem [shape: f32[8,1], index: 2, kind: input, shape index: {}]
  %s3 = inlined_call_operand.vmem [shape: f32[8,1], index: 3, kind: input, shape index: {}]
  %s4 = inlined_call_operand.hbm [shape: f32[2,8,512], index: 4, kind: output, shape index: {}]
  %s5 = sld [smem:[#allocation0]]
  $region57: #{tpu_custom_call.1} parent=0
    _
  %s7 = ssub.s32 1, %s5
  %s8 = scalar_select 0, %s7, %s5
  $region1: #{tpu_custom_call.1} parent=0
    #allocation4 [shape = 'u8[2048]{0}', space=vmem, size = 0x800, scoped, tag = 'input window, operand 1, single buffered']
    #allocation5 [shape = 's32[2]{0}', space=sflag, size = 0x8, scoped, tag = 'scoped memory for tpu_custom_call.1']
    #allocation6 [shape = 's32[2]{0}', space=sflag, size = 0x8, scoped, tag = 'scoped memory for tpu_custom_call.1']
    #allocation7 [shape = 'u8[16384]{0}', space=vmem, size = 0x4000, scoped, tag = 'output window, operand 0']
    %9 = vsyncpa [#allocation5], 0
    %10 = vsyncpa [#allocation6], 0
    %s11 = scalar_lea.sflag [#allocation6], 1
    %12 = vsyncpa %s11, 0
    loop: start=0, step=1, limit=6
    $region2: #{tpu_custom_call.1} parent=1 // loop_pre_header
      _
    $region3: #{tpu_custom_call.1} parent=1 // loop_header
      %s14 = sphi 0, %s18
      %p15 = scmp.ge.s32.totalorder %s14, 6
      %s21 = sphi 0, %s33
      %s22 = sphi 0, %s29
      %s23 = sphi 0, %s21
      %s24 = sphi 0, %s22
      %s25 = sphi 0, %s23
      %s26 = sphi 0, %s24
      %s36 = sphi 0, %s38
      %s39 = sphi 0, %s36
      %s40 = sphi 0, %s39
      %s56 = sphi 0, %s40
      %s60 = sphi 0, %s60
      %s62 = sphi 0, %s60
      %s63 = sphi 0, %s62
      %s77 = sphi 0, %s63
      %s81 = sphi 0, %s81
      %s83 = sphi 0, %s81
      %s84 = sphi 0, %s83
      %s98 = sphi 0, %s84
      %s102 = sphi 0, %s102
      %s104 = sphi 0, %s102
      %s105 = sphi 0, %s104
      %s119 = sphi 0, %s105
      %s127 = sphi 0, %s129
      %s130 = sphi 0, %s127
      %s131 = sphi 0, %s130
      %s147 = sphi 0, %s131
    $region4: #{tpu_custom_call.1} parent=1 // loop_header_branch
      %17 = sbr.rel (%p15) target = $region8
    $region5: #{tpu_custom_call.1} parent=1 // loop_body
      %s19 = ssub.s32 %s14, 1
      %s20 = ssub.s32 %s14, 2
      %s27 = sadd.s32 1, %s22
      %p28 = scmp.ge.s32.totalorder %s27, 2
      %s29 = scalar_select %p28, 0, %s27
      %s30 = sadd.s32 1, %s21
      %s31 = scalar_select %p28, %s30, %s21
      %p32 = scmp.ge.s32.totalorder %s31, 2
      %s33 = scalar_select %p32, 0, %s31
      %s34 = ssub.s32 %s21, %s33
      %p35 = scmp.eq.s32.totalorder %s34, 0
      %s37 = sadd.s32 %s36, 1
      %s38 = scalar_select %p35, %s36, %s37
      %p41 = pneg %p35
      %p42 = scmp.eq.s32.totalorder %s14, 3
      %p43 = por %p41, %p42
      %p44 = scmp.ne.s32.totalorder %s36, %s39
      %p45 = scmp.eq.s32.totalorder %s14, 0
      %p46 = por %p44, %p45
      %p47 = scmp.ne.s32.totalorder %s36, %s39
      %p48 = scmp.eq.s32.totalorder %s19, 3
      %p49 = por %p47, %p48
      %p50 = scmp.ne.s32.totalorder %s39, %s40
      %p51 = scmp.eq.s32.totalorder %s19, 0
      %p52 = por %p50, %p51
      %p53 = scmp.ne.s32.totalorder %s39, %s40
      %p54 = scmp.eq.s32.totalorder %s20, 3
      %p55 = por %p53, %p54
      %p57 = scmp.ne.s32.totalorder %s40, %s56
      %p58 = scmp.eq.s32.totalorder %s20, 0
      %p59 = por %p57, %p58
      %s61 = sadd.s32 %s60, 1
      %p64 = scmp.eq.s32.totalorder %s14, 3
      %p65 = scmp.ne.s32.totalorder %s60, %s62
      %p66 = scmp.eq.s32.totalorder %s14, 0
      %p67 = por %p65, %p66
      %p68 = scmp.ne.s32.totalorder %s60, %s62
      %p69 = scmp.eq.s32.totalorder %s19, 3
      %p70 = por %p68, %p69
      %p71 = scmp.ne.s32.totalorder %s62, %s63
      %p72 = scmp.eq.s32.totalorder %s19, 0
      %p73 = por %p71, %p72
      %p74 = scmp.ne.s32.totalorder %s62, %s63
      %p75 = scmp.eq.s32.totalorder %s20, 3
      %p76 = por %p74, %p75
      %p78 = scmp.ne.s32.totalorder %s63, %s77
      %p79 = scmp.eq.s32.totalorder %s20, 0
      %p80 = por %p78, %p79
      %s82 = sadd.s32 %s81, 1
      %p85 = scmp.eq.s32.totalorder %s14, 3
      %p86 = scmp.ne.s32.totalorder %s81, %s83
      %p87 = scmp.eq.s32.totalorder %s14, 0
      %p88 = por %p86, %p87
      %p89 = scmp.ne.s32.totalorder %s81, %s83
      %p90 = scmp.eq.s32.totalorder %s19, 3
      %p91 = por %p89, %p90
      %p92 = scmp.ne.s32.totalorder %s83, %s84
      %p93 = scmp.eq.s32.totalorder %s19, 0
      %p94 = por %p92, %p93
      %p95 = scmp.ne.s32.totalorder %s83, %s84
      %p96 = scmp.eq.s32.totalorder %s20, 3
      %p97 = por %p95, %p96
      %p99 = scmp.ne.s32.totalorder %s84, %s98
      %p100 = scmp.eq.s32.totalorder %s20, 0
      %p101 = por %p99, %p100
      %s103 = sadd.s32 %s102, 1
      %p106 = scmp.eq.s32.totalorder %s14, 3
      %p107 = scmp.ne.s32.totalorder %s102, %s104
      %p108 = scmp.eq.s32.totalorder %s14, 0
      %p109 = por %p107, %p108
      %p110 = scmp.ne.s32.totalorder %s102, %s104
      %p111 = scmp.eq.s32.totalorder %s19, 3
      %p112 = por %p110, %p111
      %p113 = scmp.ne.s32.totalorder %s104, %s105
      %p114 = scmp.eq.s32.totalorder %s19, 0
      %p115 = por %p113, %p114
      %p116 = scmp.ne.s32.totalorder %s104, %s105
      %p117 = scmp.eq.s32.totalorder %s20, 3
      %p118 = por %p116, %p117
      %p120 = scmp.ne.s32.totalorder %s105, %s119
      %p121 = scmp.eq.s32.totalorder %s20, 0
      %p122 = por %p120, %p121
      %s123 = ssub.s32 %s21, %s33
      %s124 = ssub.s32 %s22, %s29
      %s125 = sor.u32 %s123, %s124
      %p126 = scmp.eq.s32.totalorder %s125, 0
      %s128 = sadd.s32 %s127, 1
      %s129 = scalar_select %p126, %s127, %s128
      %p132 = pneg %p126
      %p133 = scmp.eq.s32.totalorder %s14, 3
      %p134 = por %p132, %p133
      %p135 = scmp.ne.s32.totalorder %s127, %s130
      %p136 = scmp.eq.s32.totalorder %s14, 0
      %p137 = por %p135, %p136
      %p138 = scmp.ne.s32.totalorder %s127, %s130
      %p139 = scmp.eq.s32.totalorder %s19, 3
      %p140 = por %p138, %p139
      %p141 = scmp.ne.s32.totalorder %s130, %s131
      %p142 = scmp.eq.s32.totalorder %s19, 0
      %p143 = por %p141, %p142
      %p144 = scmp.ne.s32.totalorder %s130, %s131
      %p145 = scmp.eq.s32.totalorder %s20, 3
      %p146 = por %p144, %p145
      %p148 = scmp.ne.s32.totalorder %s131, %s147
      %p149 = scmp.eq.s32.totalorder %s20, 0
      %p150 = por %p148, %p149
      %p151 = scmp.le.s32.totalorder 1, %s14
      %p152 = scmp.lt.s32.totalorder %s14, 5
      %p153 = pnand %p151, %p152
      %p154 = pneg %p153
      // Predicated region
      $region9: #{tpu_custom_call.1} parent=5 // pred_check
        _
      $region10: #{tpu_custom_call.1} parent=5 // pred_check_branch
        %156 = sbr.rel (%p153) target = $region12
      $region11: #{tpu_custom_call.1} parent=5 // pred_region
        %s157 = ssub.s32 %s14, 1
        // Predicated region
        $region13: #{tpu_custom_call.1} parent=11 // pred_check
          %p158 = pneg %p73
        $region14: #{tpu_custom_call.1} parent=11 // pred_check_branch
          %160 = sbr.rel (%p158) target = $region16
        $region15: #{tpu_custom_call.1} parent=11 // pred_region
          %s162 = ssub.s32 64, 64
          %163 = vsyncadd [#allocation5], %s162
          %s165 = sshll.u32 [#allocation4], 4
          %s166 = int_to_ptr.vmem [resolvable:$true] %s165
          %168 = dma.hbm_to_vmem [thread:$0]  %s1, 64, %s166, [#allocation5]
        $region16: #{tpu_custom_call.1} parent=11 // pred_fallthru
          _
        // Predicated region
        $region17: #{tpu_custom_call.1} parent=11 // pred_check
          %p169 = pneg %p94
        $region18: #{tpu_custom_call.1} parent=11 // pred_check_branch
          %171 = sbr.rel (%p169) target = $region20
        $region19: #{tpu_custom_call.1} parent=11 // pred_region
          _
        $region20: #{tpu_custom_call.1} parent=11 // pred_fallthru
          _
        // Predicated region
        $region21: #{tpu_custom_call.1} parent=11 // pred_check
          %p172 = pneg %p115
        $region22: #{tpu_custom_call.1} parent=11 // pred_check_branch
          %174 = sbr.rel (%p172) target = $region24
        $region23: #{tpu_custom_call.1} parent=11 // pred_region
          _
        $region24: #{tpu_custom_call.1} parent=11 // pred_fallthru
          _
      $region12: #{tpu_custom_call.1} parent=5 // pred_fallthru
        _
      %p175 = scmp.lt.s32.totalorder %s14, 4
      // Predicated region
      $region25: #{tpu_custom_call.1} parent=5 // pred_check
        %p176 = pneg %p175
      $region26: #{tpu_custom_call.1} parent=5 // pred_check_branch
        %178 = sbr.rel (%p176) target = $region28
      $region27: #{tpu_custom_call.1} parent=5 // pred_region
        // Predicated region
        $region29: #{tpu_custom_call.1} parent=27 // pred_check
          %p179 = pneg %p46
        $region30: #{tpu_custom_call.1} parent=27 // pred_check_branch
          %181 = sbr.rel (%p179) target = $region32
        $region31: #{tpu_custom_call.1} parent=27 // pred_region
          %p182 = scmp.lt.s32.totalorder %s21, 1
          %s183 = scalar_select %p182, %s21, 1
          %s184 = smul.addr %s183, 2
          %s185 = smul.addr %s184, 4
          %s186 = scalar_lea.vmem %s0, %s185
        $region32: #{tpu_custom_call.1} parent=27 // pred_fallthru
          _
      $region28: #{tpu_custom_call.1} parent=5 // pred_fallthru
        _
      %p187 = scmp.le.s32.totalorder 1, %s14
      %p188 = scmp.lt.s32.totalorder %s14, 5
      %p189 = pnand %p187, %p188
      %p190 = pneg %p189
      // Predicated region
      $region33: #{tpu_custom_call.1} parent=5 // pred_check
        _
      $region34: #{tpu_custom_call.1} parent=5 // pred_check_branch
        %192 = sbr.rel (%p189) target = $region36
      $region35: #{tpu_custom_call.1} parent=5 // pred_region
        %s193 = ssub.s32 %s14, 1
        // Predicated region
        $region37: #{tpu_custom_call.1} parent=35 // pred_check
          %p194 = pneg %p73
        $region38: #{tpu_custom_call.1} parent=35 // pred_check_branch
          %196 = sbr.rel (%p194) target = $region40
        $region39: #{tpu_custom_call.1} parent=35 // pred_region
          %197 = dma.done [#allocation5], 64
        $region40: #{tpu_custom_call.1} parent=35 // pred_fallthru
          _
        %p198 = scmp.lt.s32.totalorder %s23, 1
        %s199 = scalar_select %p198, %s23, 1
        %s200 = smul.addr %s199, 2
        %s201 = smul.addr %s200, 4
        %s202 = scalar_lea.vmem %s0, %s201
        %p203 = pneg %p52
        %p204 = pneg %p49
        %p205 = pneg %p73
        %p206 = pneg %p70
        %p207 = pneg %p94
        %p208 = pneg %p91
        %p209 = pneg %p115
        %p210 = pneg %p112
        %p211 = pneg %p143
        %p212 = pneg %p140
        %s213 = sand.u32 %s130, 1
        %s214 = scalar_lea.sflag [#allocation6], %s213
        %s215 = sand.u32 %s130, 1
        %s216 = smul.addr %s215, 16
        %s217 = scalar_lea.vmem [#allocation7], %s216
        %p218 = scmp.lt.s32.totalorder %s23, 1
        %s219 = scalar_select %p218, %s23, 1
        %s220 = smul.addr %s219, 2
        %s221 = smul.addr %s220, 4
        %s222 = scalar_lea.vmem %s0, %s221
        %s223 = smul.u32 2, %s24
        %p225 = scmp.eq.s32.totalorder %s24, 0
        // Predicated region
        $region41: #{tpu_custom_call.1} parent=35 // pred_check
          %p226 = pneg %p225
        $region42: #{tpu_custom_call.1} parent=35 // pred_check_branch
          %228 = sbr.rel (%p226) target = $region44
        $region43: #{tpu_custom_call.1} parent=35 // pred_region
          %vm229 = vcmask 1041408
          %vm230 = vcmask 1043458
          %vm231 = vmor %vm230, %vm229
          %vm232 = vcmask 308228
          %vm233 = vmor %vm232, %vm231
          %234 = vst.msk [vmem:[#allocation2] sm:$0x3f] %vm233, 0
          %235 = vst.msk [vmem:[#allocation2 + $0x6] sm:$0x3f] %vm233, 0
          %236 = vst [vmem:[#allocation3] sm:$0xff] 0
          %237 = vst [vmem:[#allocation3 + $0x8] sm:$0xff] 0
          %238 = vst [vmem:[#allocation3 + $0x10] sm:$0xff] 0
          %239 = vst [vmem:[#allocation3 + $0x18] sm:$0xff] 0
          %240 = vst [vmem:[#allocation3 + $0x20] sm:$0xff] 0
          %241 = vst [vmem:[#allocation3 + $0x28] sm:$0xff] 0
          %242 = vst [vmem:[#allocation3 + $0x30] sm:$0xff] 0
          %243 = vst [vmem:[#allocation3 + $0x38] sm:$0xff] 0
          %244 = vst [vmem:[#allocation3 + $0x40] sm:$0xff] 0
          %v245 = vld [vmem:[%s222] sm:$0xf]
          %v246 = vpack.c.bf16 %v245, %v245
          %v249 = vunpack.c.l.s4 1983009808
          %v250 = vunpack.c.0.s8 %v249
          %v251 = vlaneseq
          %v252 = vshrl.u32 %v251, 7
          %v253 = vsub.s32 %v250, %v252
          %v254 = vrot.slane %v246, %v253
          %255 = vrot.lane.b32.xlu0 %v254, 19
          %v256 = vpop.permute.xlu0 %255
          %vm258 = vcmask 279704
          %259 = vst.msk [vmem:[#allocation2] sm:$0x3] %vm258, %v256
          %v260 = vld [vmem:[%s222] sm:$0xf]
          %v261 = vpack.c.bf16 %v260, %v260
          %v264 = vunpack.c.l.s4 1983009808
          %v265 = vunpack.c.0.s8 %v264
          %v266 = vlaneseq
          %v267 = vshrl.u32 %v266, 7
          %v268 = vsub.s32 %v265, %v267
          %v269 = vrot.slane %v261, %v268
          %270 = vrot.lane.b32.xlu0 %v269, 21
          %v271 = vpop.permute.xlu0 %270
          %vm273 = vcmask 427304
          %274 = vst.msk [vmem:[#allocation2] sm:$0x3] %vm273, %v271
          %v275 = vld [vmem:[%s222] sm:$0xf]
          %v276 = vpack.c.bf16 %v275, %v275
          %v279 = vunpack.c.l.s4 1983009808
          %v280 = vunpack.c.0.s8 %v279
          %v281 = vlaneseq
          %v282 = vshrl.u32 %v281, 7
          %v283 = vsub.s32 %v280, %v282
          %v284 = vrot.slane %v276, %v283
          %285 = vrot.lane.b32.xlu0 %v284, 23
          %v286 = vpop.permute.xlu0 %285
          %vm288 = vcmask 574904
          %289 = vst.msk [vmem:[#allocation2] sm:$0x3] %vm288, %v286
          %v290 = vld [vmem:[%s222] sm:$0xf]
          %v291 = vpack.c.bf16 %v290, %v290
          %v294 = vunpack.c.l.s4 1983009808
          %v295 = vunpack.c.0.s8 %v294
          %v296 = vlaneseq
          %v297 = vshrl.u32 %v296, 7
          %v298 = vsub.s32 %v295, %v297
          %v299 = vrot.slane %v291, %v298
          %300 = vrot.lane.b32.xlu0 %v299, 25
          %v301 = vpop.permute.xlu0 %300
          %vm303 = vcmask 722504
          %304 = vst.msk [vmem:[#allocation2] sm:$0x3] %vm303, %v301
          %v305 = vld [vmem:[%s222] sm:$0xf]
          %v306 = vpack.c.bf16 %v305, %v305
          %v309 = vunpack.c.l.s4 1983009808
          %v310 = vunpack.c.0.s8 %v309
          %v311 = vlaneseq
          %v312 = vshrl.u32 %v311, 7
          %v313 = vsub.s32 %v310, %v312
          %v314 = vrot.slane %v306, %v313
          %315 = vrot.lane.b32.xlu0 %v314, 27
          %v316 = vpop.permute.xlu0 %315
          %vm318 = vcmask 870104
          %319 = vst.msk [vmem:[#allocation2] sm:$0x3] %vm318, %v316
          %v320 = vld [vmem:[%s222] sm:$0xf]
          %v321 = vpack.c.bf16 %v320, %v320
          %v324 = vunpack.c.l.s4 1983009808
          %v325 = vunpack.c.0.s8 %v324
          %v326 = vlaneseq
          %v327 = vshrl.u32 %v326, 7
          %v328 = vsub.s32 %v325, %v327
          %v329 = vrot.slane %v321, %v328
          %330 = vrot.lane.b32.xlu0 %v329, 29
          %v331 = vpop.permute.xlu0 %330
          %vm333 = vcmask 1017704
          %334 = vst.msk [vmem:[#allocation2] sm:$0x3] %vm333, %v331
          %v335 = vld [vmem:[%s222] sm:$0xf]
          %v336 = vpack.c.bf16 %v335, %v335
          %v339 = vunpack.c.l.s4 1983009808
          %v340 = vunpack.c.0.s8 %v339
          %v341 = vlaneseq
          %v342 = vshrl.u32 %v341, 7
          %v343 = vsub.s32 %v340, %v342
          %v344 = vrot.slane %v336, %v343
          %345 = vrot.lane.b32.xlu0 %v344, 31
          %v346 = vpop.permute.xlu0 %345
          %v347 = vrot.slane %v346, 6
          %vm348 = vcmask 252928
          %v349 = vsel %vm348, %v347, %v346
          %vm351 = vcmask 1042424
          %vm352 = vcmask 117762
          %vm353 = vmor %vm352, %vm351
          %354 = vst.msk [vmem:[#allocation2] sm:$0xf] %vm353, %v349
          %v355 = vld [vmem:[%s222] sm:$0xf]
          %v356 = vpack.c.bf16 %v355, %v355
          %v359 = vunpack.c.l.s4 1983009808
          %v360 = vunpack.c.0.s8 %v359
          %v361 = vlaneseq
          %v362 = vshrl.u32 %v361, 7
          %v363 = vsub.s32 %v360, %v362
          %v364 = vrot.slane %v356, %v363
          %365 = vrot.lane.b32.xlu0 %v364, 33
          %v366 = vpop.permute.xlu0 %365
          %vm368 = vcmask 263304
          %369 = vst.msk [vmem:[#allocation2 + $0x2] sm:$0x3] %vm368, %v366
          %v370 = vld [vmem:[%s222 + $0x4] sm:$0xf]
          %v371 = vpack.c.bf16 %v370, %v370
          %v374 = vunpack.c.l.s4 1983009808
          %v375 = vunpack.c.0.s8 %v374
          %v376 = vlaneseq
          %v377 = vshrl.u32 %v376, 7
          %v378 = vsub.s32 %v375, %v377
          %v379 = vrot.slane %v371, %v378
          %380 = vrot.lane.b32.xlu0 %v379, 35
          %v381 = vpop.permute.xlu0 %380
          %vm383 = vcmask 410904
          %384 = vst.msk [vmem:[#allocation2 + $0x2] sm:$0x3] %vm383, %v381
          %v385 = vld [vmem:[%s222 + $0x4] sm:$0xf]
          %v386 = vpack.c.bf16 %v385, %v385
          %v389 = vunpack.c.l.s4 1983009808
          %v390 = vunpack.c.0.s8 %v389
          %v391 = vlaneseq
          %v392 = vshrl.u32 %v391, 7
          %v393 = vsub.s32 %v390, %v392
          %v394 = vrot.slane %v386, %v393
          %395 = vrot.lane.b32.xlu0 %v394, 37
          %v396 = vpop.permute.xlu0 %395
          %vm398 = vcmask 558504
          %399 = vst.msk [vmem:[#allocation2 + $0x2] sm:$0x3] %vm398, %v396
          %v400 = vld [vmem:[%s222 + $0x4] sm:$0xf]
          %v401 = vpack.c.bf16 %v400, %v400
          %v404 = vunpack.c.l.s4 1983009808
          %v405 = vunpack.c.0.s8 %v404
          %v406 = vlaneseq
          %v407 = vshrl.u32 %v406, 7
          %v408 = vsub.s32 %v405, %v407
          %v409 = vrot.slane %v401, %v408
          %410 = vrot.lane.b32.xlu0 %v409, 39
          %v411 = vpop.permute.xlu0 %410
          %vm413 = vcmask 706104
          %414 = vst.msk [vmem:[#allocation2 + $0x2] sm:$0x3] %vm413, %v411
          %v415 = vld [vmem:[%s222 + $0x4] sm:$0xf]
          %v416 = vpack.c.bf16 %v415, %v415
          %v419 = vunpack.c.l.s4 1983009808
          %v420 = vunpack.c.0.s8 %v419
          %v421 = vlaneseq
          %v422 = vshrl.u32 %v421, 7
          %v423 = vsub.s32 %v420, %v422
          %v424 = vrot.slane %v416, %v423
          %425 = vrot.lane.b32.xlu0 %v424, 41
          %v426 = vpop.permute.xlu0 %425
          %vm428 = vcmask 853704
          %429 = vst.msk [vmem:[#allocation2 + $0x2] sm:$0x3] %vm428, %v426
          %v430 = vld [vmem:[%s222 + $0x4] sm:$0xf]
          %v431 = vpack.c.bf16 %v430, %v430
          %v434 = vunpack.c.l.s4 1983009808
          %v435 = vunpack.c.0.s8 %v434
          %v436 = vlaneseq
          %v437 = vshrl.u32 %v436, 7
          %v438 = vsub.s32 %v435, %v437
          %v439 = vrot.slane %v431, %v438
          %440 = vrot.lane.b32.xlu0 %v439, 43
          %v441 = vpop.permute.xlu0 %440
          %vm443 = vcmask 1001304
          %444 = vst.msk [vmem:[#allocation2 + $0x2] sm:$0x3] %vm443, %v441
          %v445 = vld [vmem:[%s222 + $0x4] sm:$0xf]
          %v446 = vpack.c.bf16 %v445, %v445
          %v449 = vunpack.c.l.s4 1983009808
          %v450 = vunpack.c.0.s8 %v449
          %v451 = vlaneseq
          %v452 = vshrl.u32 %v451, 7
          %v453 = vsub.s32 %v450, %v452
          %v454 = vrot.slane %v446, %v453
          %455 = vrot.lane.b32.xlu0 %v454, 45
          %v456 = vpop.permute.xlu0 %455
          %v457 = vrot.slane %v456, 6
          %vm458 = vcmask 367616
          %v459 = vsel %vm458, %v457, %v456
          %vm461 = vcmask 1042408
          %vm462 = vcmask 101378
          %vm463 = vmor %vm462, %vm461
          %464 = vst.msk [vmem:[#allocation2 + $0x2] sm:$0xf] %vm463, %v459
          %v465 = vld [vmem:[%s222 + $0x4] sm:$0xf]
          %v466 = vpack.c.bf16 %v465, %v465
          %v469 = vunpack.c.l.s4 1983009808
          %v470 = vunpack.c.0.s8 %v469
          %v471 = vlaneseq
          %v472 = vshrl.u32 %v471, 7
          %v473 = vsub.s32 %v470, %v472
          %v474 = vrot.slane %v466, %v473
          %475 = vrot.lane.b32.xlu0 %v474, 47
          %v476 = vpop.permute.xlu0 %475
          %vm478 = vcmask 246904
          %479 = vst.msk [vmem:[#allocation2 + $0x4] sm:$0x3] %vm478, %v476
          %v480 = vld [vmem:[%s222 + $0x4] sm:$0xf]
          %v481 = vpack.c.bf16 %v480, %v480
          %v484 = vunpack.c.l.s4 1983009808
          %v485 = vunpack.c.0.s8 %v484
          %v486 = vlaneseq
          %v487 = vshrl.u32 %v486, 7
          %v488 = vsub.s32 %v485, %v487
          %v489 = vrot.slane %v481, %v488
          %490 = vrot.lane.b32.xlu0 %v489, 49
          %v491 = vpop.permute.xlu0 %490
          %vm493 = vcmask 304392
          %494 = vst.msk [vmem:[#allocation2 + $0x4] sm:$0x3] %vm493, %v491
          %v495 = vld [vmem:[%s222 + $0x4] sm:$0xf]
          %v496 = vpack.c.bf16 %v495, %v495
          %v499 = vunpack.c.l.s4 1983009808
          %v500 = vunpack.c.0.s8 %v499
          %v501 = vlaneseq
          %v502 = vshrl.u32 %v501, 7
          %v503 = vsub.s32 %v500, %v502
          %v504 = vrot.slane %v496, %v503
          %505 = vrot.lane.b32.xlu0 %v504, 45
          %v506 = vpop.permute.xlu0 %505
          %s508 = scalar_lea.vmem [#allocation2], 6
          %vm509 = vcmask 99328
          %510 = vst.msk [vmem:[%s508] sm:$0x3] %vm509, %v506
          %v511 = vld [vmem:[%s222 + $0x4] sm:$0xf]
          %v512 = vpack.c.bf16 %v511, %v511
          %v515 = vunpack.c.l.s4 1983009808
          %v516 = vunpack.c.0.s8 %v515
          %v517 = vlaneseq
          %v518 = vshrl.u32 %v517, 7
          %v519 = vsub.s32 %v516, %v518
          %v520 = vrot.slane %v512, %v519
          %521 = vrot.lane.b32.xlu0 %v520, 47
          %v522 = vpop.permute.xlu0 %521
          %524 = vst.msk [vmem:[%s508] sm:$0x3] %vm478, %v522
          %v525 = vld [vmem:[%s222 + $0x4] sm:$0xf]
          %v526 = vpack.c.bf16 %v525, %v525
          %v529 = vunpack.c.l.s4 1983009808
          %v530 = vunpack.c.0.s8 %v529
          %v531 = vlaneseq
          %v532 = vshrl.u32 %v531, 7
          %v533 = vsub.s32 %v530, %v532
          %v534 = vrot.slane %v526, %v533
          %535 = vrot.lane.b32.xlu0 %v534, 49
          %v536 = vpop.permute.xlu0 %535
          %vm538 = vcmask 394504
          %539 = vst.msk [vmem:[%s508] sm:$0x3] %vm538, %v536
        $region44: #{tpu_custom_call.1} parent=35 // pred_fallthru
          _
        %s540 = smul.u32 %s24, 3
        %s541 = smul.addr %s540, 2
        %s542 = scalar_lea.vmem [#allocation2], %s541
        %v543 = vld [vmem:[%s542] sm:$0xf]
        %v546 = vunpack.c.l.s4 1983009808
        %v547 = vunpack.c.0.s8 %v546
        %v548 = vlaneseq
        %v549 = vshrl.u32 %v548, 7
        %v550 = vsub.s32 %v547, %v549
        %v551 = vrot.slane %v543, %v550
        %553 = vst [vmem:[#allocation3] sm:$0x33] %v551
        %v554 = vld [vmem:[%s542] sm:$0x3f]
        %v556 = vcombine.high %v554, %v554
        %v558 = vunpack.c.l.s4 1983009808
        %v559 = vunpack.c.0.s8 %v558
        %v560 = vlaneseq
        %v561 = vshrl.u32 %v560, 7
        %v562 = vsub.s32 %v559, %v561
        %v563 = vrot.slane %v554, %v562
        %v565 = vunpack.c.l.s4 1983009808
        %v566 = vunpack.c.0.s8 %v565
        %v567 = vlaneseq
        %v568 = vshrl.u32 %v567, 7
        %v569 = vsub.s32 %v566, %v568
        %v570 = vrot.slane %v556, %v569
        %571 = vrot.lane.b32.xlu0 %v563, 127
        %v572 = vpop.permute.xlu0 %571
        %573 = vrot.lane.b32.xlu0 %v570, 127
        %v574 = vpop.permute.xlu0 %573
        %v575 = vrot.slane %v572, 4
        %v576 = vrot.slane %v574, 4
        %vm577 = vcmask 1043456
        %v578 = vsel %vm577, %v575, %v576
        %vm579 = vcmask 1039360
        %v580 = vsel %vm579, %v572, %v578
        %582 = vst [vmem:[#allocation3 + $0x8] sm:$0x33] %v580
        %v583 = vld [vmem:[%s542] sm:$0x3f]
        %v585 = vcombine.high %v583, %v583
        %v587 = vunpack.c.l.s4 1983009808
        %v588 = vunpack.c.0.s8 %v587
        %v589 = vlaneseq
        %v590 = vshrl.u32 %v589, 7
        %v591 = vsub.s32 %v588, %v590
        %v592 = vrot.slane %v583, %v591
        %v594 = vunpack.c.l.s4 1983009808
        %v595 = vunpack.c.0.s8 %v594
        %v596 = vlaneseq
        %v597 = vshrl.u32 %v596, 7
        %v598 = vsub.s32 %v595, %v597
        %v599 = vrot.slane %v585, %v598
        %600 = vrot.lane.b32.xlu0 %v592, 126
        %v601 = vpop.permute.xlu0 %600
        %602 = vrot.lane.b32.xlu0 %v599, 126
        %v603 = vpop.permute.xlu0 %602
        %v604 = vrot.slane %v601, 4
        %v605 = vrot.slane %v603, 4
        %v606 = vsel %vm577, %v604, %v605
        %vm607 = vcmask 1031168
        %v608 = vsel %vm607, %v601, %v606
        %610 = vst [vmem:[#allocation3 + $0x10] sm:$0x33] %v608
        %v611 = vld [vmem:[%s542] sm:$0x3f]
        %v613 = vcombine.high %v611, %v611
        %v615 = vunpack.c.l.s4 1983009808
        %v616 = vunpack.c.0.s8 %v615
        %v617 = vlaneseq
        %v618 = vshrl.u32 %v617, 7
        %v619 = vsub.s32 %v616, %v618
        %v620 = vrot.slane %v611, %v619
        %v622 = vunpack.c.l.s4 1983009808
        %v623 = vunpack.c.0.s8 %v622
        %v624 = vlaneseq
        %v625 = vshrl.u32 %v624, 7
        %v626 = vsub.s32 %v623, %v625
        %v627 = vrot.slane %v613, %v626
        %628 = vrot.lane.b32.xlu0 %v620, 110
        %v629 = vpop.permute.xlu0 %628
        %630 = vrot.lane.b32.xlu0 %v627, 110
        %v631 = vpop.permute.xlu0 %630
        %v632 = vrot.slane %v629, 4
        %v633 = vrot.slane %v631, 4
        %v634 = vsel %vm577, %v632, %v633
        %vm635 = vcmask 900096
        %v636 = vsel %vm635, %v629, %v634
        %638 = vst [vmem:[#allocation3 + $0x18] sm:$0x33] %v636
        %v639 = vld [vmem:[%s542] sm:$0x3f]
        %v641 = vcombine.high %v639, %v639
        %v643 = vunpack.c.l.s4 1983009808
        %v644 = vunpack.c.0.s8 %v643
        %v645 = vlaneseq
        %v646 = vshrl.u32 %v645, 7
        %v647 = vsub.s32 %v644, %v646
        %v648 = vrot.slane %v639, %v647
        %v650 = vunpack.c.l.s4 1983009808
        %v651 = vunpack.c.0.s8 %v650
        %v652 = vlaneseq
        %v653 = vshrl.u32 %v652, 7
        %v654 = vsub.s32 %v651, %v653
        %v655 = vrot.slane %v641, %v654
        %656 = vrot.lane.b32.xlu0 %v648, 109
        %v657 = vpop.permute.xlu0 %656
        %658 = vrot.lane.b32.xlu0 %v655, 109
        %v659 = vpop.permute.xlu0 %658
        %v660 = vrot.slane %v657, 4
        %v661 = vrot.slane %v659, 4
        %v662 = vsel %vm577, %v660, %v661
        %vm663 = vcmask 891904
        %v664 = vsel %vm663, %v657, %v662
        %666 = vst [vmem:[#allocation3 + $0x20] sm:$0x33] %v664
        %v667 = vld [vmem:[%s542] sm:$0x3f]
        %v669 = vcombine.high %v667, %v667
        %v671 = vunpack.c.l.s4 1983009808
        %v672 = vunpack.c.0.s8 %v671
        %v673 = vlaneseq
        %v674 = vshrl.u32 %v673, 7
        %v675 = vsub.s32 %v672, %v674
        %v676 = vrot.slane %v667, %v675
        %v678 = vunpack.c.l.s4 1983009808
        %v679 = vunpack.c.0.s8 %v678
        %v680 = vlaneseq
        %v681 = vshrl.u32 %v680, 7
        %v682 = vsub.s32 %v679, %v681
        %v683 = vrot.slane %v669, %v682
        %684 = vrot.lane.b32.xlu0 %v676, 108
        %v685 = vpop.permute.xlu0 %684
        %686 = vrot.lane.b32.xlu0 %v683, 108
        %v687 = vpop.permute.xlu0 %686
        %v688 = vrot.slane %v685, 4
        %v689 = vrot.slane %v687, 4
        %v690 = vsel %vm577, %v688, %v689
        %vm691 = vcmask 883712
        %v692 = vsel %vm691, %v685, %v690
        %694 = vst [vmem:[#allocation3 + $0x28] sm:$0x33] %v692
        %v695 = vld [vmem:[%s542] sm:$0x3f]
        %v697 = vcombine.high %v695, %v695
        %v699 = vunpack.c.l.s4 1983009808
        %v700 = vunpack.c.0.s8 %v699
        %v701 = vlaneseq
        %v702 = vshrl.u32 %v701, 7
        %v703 = vsub.s32 %v700, %v702
        %v704 = vrot.slane %v695, %v703
        %v706 = vunpack.c.l.s4 1983009808
        %v707 = vunpack.c.0.s8 %v706
        %v708 = vlaneseq
        %v709 = vshrl.u32 %v708, 7
        %v710 = vsub.s32 %v707, %v709
        %v711 = vrot.slane %v697, %v710
        %712 = vrot.lane.b32.xlu0 %v704, 92
        %v713 = vpop.permute.xlu0 %712
        %714 = vrot.lane.b32.xlu0 %v711, 92
        %v715 = vpop.permute.xlu0 %714
        %v716 = vrot.slane %v713, 4
        %v717 = vrot.slane %v715, 4
        %v718 = vsel %vm577, %v716, %v717
        %vm719 = vcmask 752640
        %v720 = vsel %vm719, %v713, %v718
        %722 = vst [vmem:[#allocation3 + $0x30] sm:$0x33] %v720
        %v723 = vld [vmem:[%s542] sm:$0x3f]
        %v725 = vcombine.high %v723, %v723
        %v727 = vunpack.c.l.s4 1983009808
        %v728 = vunpack.c.0.s8 %v727
        %v729 = vlaneseq
        %v730 = vshrl.u32 %v729, 7
        %v731 = vsub.s32 %v728, %v730
        %v732 = vrot.slane %v723, %v731
        %v734 = vunpack.c.l.s4 1983009808
        %v735 = vunpack.c.0.s8 %v734
        %v736 = vlaneseq
        %v737 = vshrl.u32 %v736, 7
        %v738 = vsub.s32 %v735, %v737
        %v739 = vrot.slane %v725, %v738
        %740 = vrot.lane.b32.xlu0 %v732, 91
        %v741 = vpop.permute.xlu0 %740
        %742 = vrot.lane.b32.xlu0 %v739, 91
        %v743 = vpop.permute.xlu0 %742
        %v744 = vrot.slane %v741, 4
        %v745 = vrot.slane %v743, 4
        %v746 = vsel %vm577, %v744, %v745
        %vm747 = vcmask 744448
        %v748 = vsel %vm747, %v741, %v746
        %750 = vst [vmem:[#allocation3 + $0x38] sm:$0x33] %v748
        %v751 = vld [vmem:[%s542] sm:$0x3f]
        %v753 = vcombine.high %v751, %v751
        %v755 = vunpack.c.l.s4 1983009808
        %v756 = vunpack.c.0.s8 %v755
        %v757 = vlaneseq
        %v758 = vshrl.u32 %v757, 7
        %v759 = vsub.s32 %v756, %v758
        %v760 = vrot.slane %v751, %v759
        %v762 = vunpack.c.l.s4 1983009808
        %v763 = vunpack.c.0.s8 %v762
        %v764 = vlaneseq
        %v765 = vshrl.u32 %v764, 7
        %v766 = vsub.s32 %v763, %v765
        %v767 = vrot.slane %v753, %v766
        %768 = vrot.lane.b32.xlu0 %v760, 90
        %v769 = vpop.permute.xlu0 %768
        %770 = vrot.lane.b32.xlu0 %v767, 90
        %v771 = vpop.permute.xlu0 %770
        %v772 = vrot.slane %v769, 4
        %v773 = vrot.slane %v771, 4
        %v774 = vsel %vm577, %v772, %v773
        %vm775 = vcmask 736256
        %v776 = vsel %vm775, %v769, %v774
        %778 = vst [vmem:[#allocation3 + $0x40] sm:$0x33] %v776
        %v779 = vld [vmem:[#allocation4] sm:$0xf]
        %v780 = vld [vmem:[#allocation3] sm:$0xff]
        %v781 = vld [vmem:[#allocation3 + $0x8] sm:$0xff]
        %v782 = vld [vmem:[#allocation3 + $0x10] sm:$0xff]
        %v783 = vld [vmem:[#allocation3 + $0x18] sm:$0xff]
        %v784 = vld [vmem:[#allocation3 + $0x20] sm:$0xff]
        %v785 = vld [vmem:[#allocation3 + $0x28] sm:$0xff]
        %v786 = vld [vmem:[#allocation3 + $0x30] sm:$0xff]
        %v787 = vld [vmem:[#allocation3 + $0x38] sm:$0xff]
        %v788 = vld [vmem:[#allocation3 + $0x40] sm:$0xff]
        %v789 = vld [vmem:[%s2] sm:$0xff]
        %791 = vset.pattern.permute.xlu0 0
        %792 = vperm.xlu0 %791, %v789
        %v793 = vpop.permute.xlu0 %792
        %v804 = vunpack.c.l.b16 %v780
        %v805 = vunpack.c.h.b16 %v780
        %v806 = vunpack.c.l.b16 %v781
        %v807 = vunpack.c.h.b16 %v781
        %v808 = vunpack.c.l.b16 %v782
        %v809 = vunpack.c.h.b16 %v782
        %v810 = vunpack.c.l.b16 %v783
        %v811 = vunpack.c.h.b16 %v783
        %v812 = vunpack.c.l.b16 %v784
        %v813 = vunpack.c.h.b16 %v784
        %v814 = vunpack.c.l.b16 %v785
        %v815 = vunpack.c.h.b16 %v785
        %v816 = vunpack.c.l.b16 %v786
        %v817 = vunpack.c.h.b16 %v786
        %v818 = vunpack.c.l.b16 %v787
        %v819 = vunpack.c.h.b16 %v787
        %v820 = vunpack.c.l.b16 %v788
        %v821 = vunpack.c.h.b16 %v788
        %v822 = vpack.c.b16 %v806, %v804
        %v823 = vpack.c.b16 %v807, %v805
        %v824 = vpack.c.b16 %v810, %v808
        %v825 = vpack.c.b16 %v811, %v809
        %v826 = vpack.c.b16 %v814, %v812
        %v827 = vpack.c.b16 %v815, %v813
        %v828 = vpack.c.b16 %v818, %v816
        %v829 = vpack.c.b16 %v819, %v817
        %v830 = vpack.c.b16 %v820, %v820
        %v831 = vpack.c.b16 %v821, %v821
        %vm840 = vcmask 588800
        %v842 = vsel %vm840, %v779, 0
        %vm844 = vcmask 1043456
        %v846 = vsel %vm844, %v830, 0
        %v849 = vsel %vm844, %v831, 0
        %851 = vmatprep.subr.bf16.mxu0 0
        %852 = vmatpush1.bf16.msra.mxu0 0
        %853 = vmatprep.subr.bf16.mxu0 0
        %854 = vmatpush1.bf16.msra.mxu0 0
        %855 = vmatprep.subr.bf16.mxu0 0
        %856 = vmatpush1.bf16.msra.mxu0 0
        %857 = vmatprep.subr.bf16.mxu0 %v849
        %858 = vmatpush1.bf16.msra.mxu0 %v846
        %859 = vmatprep.subr.bf16.mxu0 %v829
        %860 = vmatpush1.bf16.msra.mxu0 %v828
        %861 = vmatprep.subr.bf16.mxu0 %v827
        %862 = vmatpush1.bf16.msra.mxu0 %v826
        %863 = vmatprep.subr.bf16.mxu0 %v825
        %864 = vmatpush1.bf16.msra.mxu0 %v824
        %865 = vmatprep.subr.bf16.mxu0 %v823
        %866 = vmatpush1.bf16.msra.mxu0 %v822
        %867 = vmatprep.subr.bf16.mxu0 0
        %868 = vmatpush2.bf16.msra.mxu0 0
        %869 = vmatprep.subr.bf16.mxu0 0
        %870 = vmatpush2.bf16.msra.mxu0 0
        %871 = vmatprep.subr.bf16.mxu0 0
        %872 = vmatpush2.bf16.msra.mxu0 0
        %873 = vmatprep.subr.bf16.mxu0 0
        %874 = vmatpush2.bf16.msra.mxu0 0
        %875 = vmatprep.subr.bf16.mxu0 0
        %876 = vmatpush2.bf16.msra.mxu0 0
        %877 = vmatprep.subr.bf16.mxu0 0
        %878 = vmatpush2.bf16.msra.mxu0 0
        %879 = vmatprep.subr.bf16.mxu0 0
        %880 = vmatpush2.bf16.msra.mxu0 0
        %881 = vmatprep.subr.bf16.mxu0 0
        %882 = vmatpush2.bf16.msra.mxu0 0
        %883 = vmatprep.mubr.bf16.mxu0 0
        %884 = vmatmul.mubr.bf16.gmra.mxu0 %v842
        %v885 = vpop.f32.mrf.mxu0
        %v886 = vadd.f32 %v793, %v885
        %v887 = vpop.f32.mrf.mxu0
        %v888 = vadd.f32 %v793, %v887
        %v889 = vpop.f32.mrf.mxu0
        %v890 = vpop.f32.mrf.mxu0
        %891 = vdwg.mxu0
        %vm892 = vcmp.ge.f32.partialorder %v886, 0.0
        %vm893 = vcmp.ge.f32.partialorder %v888, 0.0
        %v894 = vld [vmem:[%s3] sm:$0xff]
        %896 = vset.pattern.permute.xlu0 0
        %897 = vperm.xlu0 %896, %v894
        %v898 = vpop.permute.xlu0 %897
        %v900 = vmul.f32 %v898, %v886
        %v901 = vmul.f32 %v898, %v888
        %v902 = vsel %vm892, %v886, %v900
        %v903 = vsel %vm893, %v888, %v901
        %904 = vst [vmem:[%s217] sm:$0xff] %v902
        %905 = vst [vmem:[%s217 + $0x8] sm:$0xff] %v903
        %s906 = sand.u32 %s130, 1
        %s907 = scalar_lea.sflag [#allocation6], %s906
        %s908 = sand.u32 %s130, 1
        %s909 = smul.addr %s908, 16
        %s910 = scalar_lea.vmem [#allocation7], %s909
        // Predicated region
        $region45: #{tpu_custom_call.1} parent=35 // pred_check
          %p911 = pneg %p140
        $region46: #{tpu_custom_call.1} parent=35 // pred_check_branch
          %913 = sbr.rel (%p911) target = $region48
        $region47: #{tpu_custom_call.1} parent=35 // pred_region
          %s914 = smul.u32 2, %s24
          %s916 = ssub.s32 256, 256
          %917 = vsyncadd %s907, %s916
          %s918 = smul.addr %s23, 4
          %s919 = sadd.s32 %s914, %s918
          %s920 = smul.addr %s919, 128
          %s921 = scalar_lea.hbm %s4, %s920
          %s923 = sshll.u32 %s910, 4
          %s924 = int_to_ptr.vmem [resolvable:$true] %s923
          %926 = dma.vmem_to_hbm [thread:$0]  %s924, 256, %s921, %s907
        $region48: #{tpu_custom_call.1} parent=35 // pred_fallthru
          _
      $region36: #{tpu_custom_call.1} parent=5 // pred_fallthru
        _
      %p927 = scmp.le.s32.totalorder 2, %s14
      // Predicated region
      $region49: #{tpu_custom_call.1} parent=5 // pred_check
        %p928 = pneg %p927
      $region50: #{tpu_custom_call.1} parent=5 // pred_check_branch
        %930 = sbr.rel (%p928) target = $region52
      $region51: #{tpu_custom_call.1} parent=5 // pred_region
        %s931 = ssub.s32 %s14, 2
        // Predicated region
        $region53: #{tpu_custom_call.1} parent=51 // pred_check
          %p932 = pneg %p146
        $region54: #{tpu_custom_call.1} parent=51 // pred_check_branch
          %934 = sbr.rel (%p932) target = $region56
        $region55: #{tpu_custom_call.1} parent=51 // pred_region
          %s935 = sand.u32 %s131, 1
          %s936 = scalar_lea.sflag [#allocation6], %s935
          %s937 = sand.u32 %s131, 1
          %s938 = smul.addr %s937, 16
          %s939 = scalar_lea.vmem [#allocation7], %s938
          %940 = dma.done %s936, 256
        $region56: #{tpu_custom_call.1} parent=51 // pred_fallthru
          _
      $region52: #{tpu_custom_call.1} parent=5 // pred_fallthru
        _
    $region6: #{tpu_custom_call.1} parent=1 // loop_footer
      %s18 = sadd.s32 1, %s14
    $region7: #{tpu_custom_call.1} parent=1 // loop_footer_branch
      %13 = sbr.rel target = $region3
    $region8: #{tpu_custom_call.1} parent=1 // loop_exit
      _
    %941 = vsyncpa [#allocation5], 1
    %s942 = scalar_lea.sflag [#allocation5], 1
    %943 = vsyncpa %s942, 1
    %944 = vsyncpa [#allocation6], 1
    %s945 = scalar_lea.sflag [#allocation6], 1
    %946 = vsyncpa %s945, 1

</llo_original>
